<compile_context>
chip_gen: v7x
topology: tpu7x:2x2x1
jax: 0.10.0
libtpu: 0.0.40
codegen_flags: <defaults>
</compile_context>

<pallas_src>
import jax
import jax.numpy as jnp
from jax.experimental import pallas as pl
from jax.experimental.pallas import tpu as pltpu

IN_F = 10
HID_F = 20
OUT_F = 5

_DEFAULT_TILE_B = 8192                 # batch rows per grid step (multiple of 8)
_VMEM_LIMIT_BYTES = 48 * 1024 * 1024   # > 32 MiB scoped default, < 64 MiB v7x physical


def _round_up(n, m):
    return ((n + m - 1) // m) * m


def _mlp_kernel(x_ref, w1_ref, b1_ref, w2_ref, b2_ref, o_ref):
    # x_ref:  (TILE_B, IN_F)   -- native row-major batch tile
    # w1_ref: (IN_F, HID_F), b1_ref: (1, HID_F)
    # w2_ref: (HID_F, OUT_F), b2_ref: (1, OUT_F)
    # o_ref:  (TILE_B, OUT_F)  -- native row-major output tile
    x = x_ref[...]
    h = jnp.dot(x, w1_ref[...], preferred_element_type=jnp.float32)
    h = jnp.maximum(h + b1_ref[...], 0.0)
    out = jnp.dot(h, w2_ref[...], preferred_element_type=jnp.float32)
    o_ref[...] = (out + b2_ref[...]).astype(o_ref.dtype)


def simple_net_forward(x, w1, b1, w2, b2, *, tile_b=_DEFAULT_TILE_B):
    """x: (B, 10) f32 -> (B, 5) f32.

    w1: (IN_F, HID_F), b1: (HID_F,), w2: (HID_F, OUT_F), b2: (OUT_F,)
    (weights are the transpose of PyTorch nn.Linear's (out, in) layout, so
    y = relu(x @ w1 + b1) @ w2 + b2 == fc2(relu(fc1(x)))).
    """
    B = x.shape[0]

    # Minimal padding only: round the batch to a sublane multiple (8).
    # No-op for aligned batches; we do NOT pad up to a full tile multiple.
    b_pad = _round_up(B, 8)
    if b_pad != B:
        x = jnp.pad(x, ((0, b_pad - B), (0, 0)))

    # Tile selection:
    #  - multiple of 8 (sublane granularity),
    #  - capped at ~half the padded batch so the grid has >= 2 steps whenever
    #    possible (lets the "parallel" axis shard across both TCs on v7x),
    #  - capped at tile_b so the VMEM footprint (x block + out block +
    #    lane-padded intermediates, double-buffered) stays under the limit.
    half = _round_up((b_pad + 1) // 2, 8)
    tile = max(8, min(_round_up(tile_b, 8), half))
    grid = (pl.cdiv(b_pad, tile),)     # ragged last tile is masked by Pallas

    b1c = b1.reshape(1, HID_F)
    b2c = b2.reshape(1, OUT_F)

    cost = pl.CostEstimate(
        flops=2 * b_pad * (IN_F * HID_F + HID_F * OUT_F),
        transcendentals=0,
        bytes_accessed=4 * (b_pad * (IN_F + OUT_F)
                            + IN_F * HID_F + HID_F
                            + HID_F * OUT_F + OUT_F),
    )

    out = pl.pallas_call(
        _mlp_kernel,
        out_shape=jax.ShapeDtypeStruct((b_pad, OUT_F), jnp.float32),
        grid=grid,
        in_specs=[
            # x tile advances with the batch grid; last dim == full array dim
            # so the (8,128) rule is satisfied without any wrapper transpose.
            pl.BlockSpec((tile, IN_F), lambda i: (i, 0)),
            # Weights/biases: constant index_map -> VMEM-resident across grid.
            pl.BlockSpec((IN_F, HID_F), lambda i: (0, 0)),
            pl.BlockSpec((1, HID_F), lambda i: (0, 0)),
            pl.BlockSpec((HID_F, OUT_F), lambda i: (0, 0)),
            pl.BlockSpec((1, OUT_F), lambda i: (0, 0)),
        ],
        out_specs=pl.BlockSpec((tile, OUT_F), lambda i: (i, 0)),
        compiler_params=pltpu.CompilerParams(
            dimension_semantics=("parallel",),
            vmem_limit_bytes=_VMEM_LIMIT_BYTES,
        ),
        cost_estimate=cost,
    )(x, w1, b1c, w2, b2c)

    # Native layout out -> no post-kernel transpose; just drop the row pad.
    return out[:B]


def init_params(key):
    """Deterministic init mimicking nn.Linear default (U(-1/sqrt(fan_in), +))."""
    k1, k2, k3, k4 = jax.random.split(key, 4)
    bound1 = 1.0 / jnp.sqrt(IN_F)
    bound2 = 1.0 / jnp.sqrt(HID_F)
    w1 = jax.random.uniform(k1, (IN_F, HID_F), jnp.float32, -bound1, bound1)
    b1 = jax.random.uniform(k2, (HID_F,), jnp.float32, -bound1, bound1)
    w2 = jax.random.uniform(k3, (HID_F, OUT_F), jnp.float32, -bound2, bound2)
    b2 = jax.random.uniform(k4, (OUT_F,), jnp.float32, -bound2, bound2)
    return w1, b1, w2, b2


if __name__ == "__main__":
    key = jax.random.PRNGKey(0)
    kx, kp = jax.random.split(key)

    batch = 8
    x = jax.random.normal(kx, (batch, IN_F), jnp.float32)
    w1, b1, w2, b2 = init_params(kp)

    out = simple_net_forward(x, w1, b1, w2, b2)
    out = jax.block_until_ready(out)

    # Pure-JAX reference check of the same math.
    ref = jnp.maximum(x @ w1 + b1, 0.0) @ w2 + b2
    assert out.shape == (batch, OUT_F)
    assert jnp.allclose(out, ref, atol=1e-4, rtol=1e-4)

    print("KERNEL_OK")
</pallas_src>

<mosaic_0001>
module attributes {stable_mosaic.version = 11 : i64} {
  func.func @_mlp_kernel(%arg0: i32, %arg1: memref<8x10xf32, #tpu.memory_space<vmem>>, %arg2: memref<10x20xf32, #tpu.memory_space<vmem>>, %arg3: memref<1x20xf32, #tpu.memory_space<vmem>>, %arg4: memref<20x5xf32, #tpu.memory_space<vmem>>, %arg5: memref<1x5xf32, #tpu.memory_space<vmem>>, %arg6: memref<8x5xf32, #tpu.memory_space<vmem>>) attributes {dimension_semantics = [#tpu.dimension_semantics<parallel>], iteration_bounds = array<i64: 1>, scalar_prefetch = 0 : i64, scratch_operands = 0 : i64, tpu.core_type = #tpu.core_type<tc>, window_params = [{transform_indices = @transform_0, window_bounds = array<i64: 8, 10>}, {pipeline_mode = #tpu.pipeline_mode<synchronous>, transform_indices = @transform_1, window_bounds = array<i64: 10, 20>}, {pipeline_mode = #tpu.pipeline_mode<synchronous>, transform_indices = @transform_2, window_bounds = array<i64: 1, 20>}, {pipeline_mode = #tpu.pipeline_mode<synchronous>, transform_indices = @transform_3, window_bounds = array<i64: 20, 5>}, {pipeline_mode = #tpu.pipeline_mode<synchronous>, transform_indices = @transform_4, window_bounds = array<i64: 1, 5>}, {transform_indices = @transform_5, window_bounds = array<i64: 8, 5>}]} {
    %c0 = arith.constant 0 : index
    %c0_0 = arith.constant 0 : index
    %0 = vector.load %arg1[%c0, %c0_0] : memref<8x10xf32, #tpu.memory_space<vmem>>, vector<8x10xf32>
    %c0_1 = arith.constant 0 : index
    %c0_2 = arith.constant 0 : index
    %1 = vector.load %arg2[%c0_1, %c0_2] : memref<10x20xf32, #tpu.memory_space<vmem>>, vector<10x20xf32>
    %cst = arith.constant dense<0.000000e+00> : vector<8x20xf32>
    %2 = tpu.matmul %0, %1, %cst {dimension_numbers = #tpu.dot_dimension_numbers<[1], [0], [0], [1], [0, 0, 1, 1], [], []>} : vector<8x10xf32>, vector<10x20xf32>, vector<8x20xf32> -> vector<8x20xf32>
    %c0_3 = arith.constant 0 : index
    %c0_4 = arith.constant 0 : index
    %3 = vector.load %arg3[%c0_3, %c0_4] : memref<1x20xf32, #tpu.memory_space<vmem>>, vector<1x20xf32>
    %4 = vector.broadcast %3 : vector<1x20xf32> to vector<8x20xf32>
    %5 = arith.addf %2, %4 : vector<8x20xf32>
    %cst_5 = arith.constant 0.000000e+00 : f32
    %6 = vector.broadcast %cst_5 : f32 to vector<8x20xf32>
    %7 = arith.maximumf %5, %6 : vector<8x20xf32>
    %c0_6 = arith.constant 0 : index
    %c0_7 = arith.constant 0 : index
    %8 = vector.load %arg4[%c0_6, %c0_7] : memref<20x5xf32, #tpu.memory_space<vmem>>, vector<20x5xf32>
    %cst_8 = arith.constant dense<0.000000e+00> : vector<8x5xf32>
    %9 = tpu.matmul %7, %8, %cst_8 {dimension_numbers = #tpu.dot_dimension_numbers<[1], [0], [0], [1], [0, 0, 1, 1], [], []>} : vector<8x20xf32>, vector<20x5xf32>, vector<8x5xf32> -> vector<8x5xf32>
    %c0_9 = arith.constant 0 : index
    %c0_10 = arith.constant 0 : index
    %10 = vector.load %arg5[%c0_9, %c0_10] : memref<1x5xf32, #tpu.memory_space<vmem>>, vector<1x5xf32>
    %11 = vector.broadcast %10 : vector<1x5xf32> to vector<8x5xf32>
    %12 = arith.addf %9, %11 : vector<8x5xf32>
    %c0_11 = arith.constant 0 : index
    %c0_12 = arith.constant 0 : index
    %13 = vector.load %arg6[%c0_11, %c0_12] : memref<8x5xf32, #tpu.memory_space<vmem>>, vector<8x5xf32>
    tpu.vector_store %arg6[%c0_11, %c0_12], %12 {strides = array<i32>} : memref<8x5xf32, #tpu.memory_space<vmem>>, vector<8x5xf32>,
    return
  }
  func.func @transform_0(%arg0: i32) -> (i32, i32) {
    %c0_i32 = arith.constant 0 : i32
    %c0_i32_0 = arith.constant 0 : i32
    return %arg0, %c0_i32 : i32, i32
  }
  func.func @transform_1(%arg0: i32) -> (i32, i32) {
    %c0_i32 = arith.constant 0 : i32
    %c0_i32_0 = arith.constant 0 : i32
    %c0_i32_1 = arith.constant 0 : i32
    return %c0_i32, %c0_i32_0 : i32, i32
  }
  func.func @transform_2(%arg0: i32) -> (i32, i32) {
    %c0_i32 = arith.constant 0 : i32
    %c0_i32_0 = arith.constant 0 : i32
    %c0_i32_1 = arith.constant 0 : i32
    return %c0_i32, %c0_i32_0 : i32, i32
  }
  func.func @transform_3(%arg0: i32) -> (i32, i32) {
    %c0_i32 = arith.constant 0 : i32
    %c0_i32_0 = arith.constant 0 : i32
    %c0_i32_1 = arith.constant 0 : i32
    return %c0_i32, %c0_i32_0 : i32, i32
  }
  func.func @transform_4(%arg0: i32) -> (i32, i32) {
    %c0_i32 = arith.constant 0 : i32
    %c0_i32_0 = arith.constant 0 : i32
    %c0_i32_1 = arith.constant 0 : i32
    return %c0_i32, %c0_i32_0 : i32, i32
  }
  func.func @transform_5(%arg0: i32) -> (i32, i32) {
    %c0_i32 = arith.constant 0 : i32
    %c0_i32_0 = arith.constant 0 : i32
    return %arg0, %c0_i32 : i32, i32
  }
}

</mosaic_0001>

<llo_original>
// kernel: tpu_custom_call.1
$region0: #{tpu_custom_call.1}
  #allocation0 [shape = 'u32[]', space=smem, size = 0x4, offset = 0x4, fixed_abs, tag = 'smem constant byte address 0x4 - core index']
  #allocation1 [shape = 'u32[144,128]{1,0:T(1,128)}', space=vmem, size = 0x12000, scoped, tag = 'internal scratch']
  %s0 = inlined_call_operand.vmem [shape: f32[8,10], index: 0, kind: input, shape index: {}]
  %s1 = inlined_call_operand.vmem [shape: f32[10,20], index: 1, kind: input, shape index: {}]
  %s2 = inlined_call_operand.vmem [shape: f32[1,20], index: 2, kind: input, shape index: {}]
  %s3 = inlined_call_operand.vmem [shape: f32[20,5], index: 3, kind: input, shape index: {}]
  %s4 = inlined_call_operand.vmem [shape: f32[1,5], index: 4, kind: input, shape index: {}]
  %s5 = inlined_call_operand.hbm [shape: f32[8,5], index: 5, kind: output, shape index: {}]
  %s6 = sld [smem:[#allocation0]]
  $region30: #{tpu_custom_call.1} parent=0
    _
  %s8 = ssub.s32 1, %s6
  %s9 = scalar_select 0, %s8, %s6
  $region1: #{tpu_custom_call.1} parent=0
    #allocation2 [shape = 'u8[4096]{0}', space=vmem, size = 0x1000, scoped, tag = 'output window, operand 0, single buffered']
    #allocation3 [shape = 's32[1]{0}', space=sflag, size = 0x4, scoped, tag = 'scoped memory for tpu_custom_call.1']
    %10 = vsyncpa [#allocation3], 0
    // Predicated region
    $region2: #{tpu_custom_call.1} parent=1 // pred_check
      _
    $region3: #{tpu_custom_call.1} parent=1 // pred_check_branch
      %12 = sbr.rel (0) target = $region5
    $region4: #{tpu_custom_call.1} parent=1 // pred_region
      _
    $region5: #{tpu_custom_call.1} parent=1 // pred_fallthru
      _
    // Predicated region
    $region6: #{tpu_custom_call.1} parent=1 // pred_check
      _
    $region7: #{tpu_custom_call.1} parent=1 // pred_check_branch
      %14 = sbr.rel (0) target = $region9
    $region8: #{tpu_custom_call.1} parent=1 // pred_region
      _
    $region9: #{tpu_custom_call.1} parent=1 // pred_fallthru
      _
    // Predicated region
    $region10: #{tpu_custom_call.1} parent=1 // pred_check
      _
    $region11: #{tpu_custom_call.1} parent=1 // pred_check_branch
      %16 = sbr.rel (0) target = $region13
    $region12: #{tpu_custom_call.1} parent=1 // pred_region
      _
    $region13: #{tpu_custom_call.1} parent=1 // pred_fallthru
      _
    // Predicated region
    $region14: #{tpu_custom_call.1} parent=1 // pred_check
      _
    $region15: #{tpu_custom_call.1} parent=1 // pred_check_branch
      %18 = sbr.rel (0) target = $region17
    $region16: #{tpu_custom_call.1} parent=1 // pred_region
      _
    $region17: #{tpu_custom_call.1} parent=1 // pred_fallthru
      _
    // Predicated region
    $region18: #{tpu_custom_call.1} parent=1 // pred_check
      _
    $region19: #{tpu_custom_call.1} parent=1 // pred_check_branch
      %20 = sbr.rel (0) target = $region21
    $region20: #{tpu_custom_call.1} parent=1 // pred_region
      _
    $region21: #{tpu_custom_call.1} parent=1 // pred_fallthru
      _
    %v21 = vld [vmem:[%s0] sm:$0xff]
    %v22 = vld [vmem:[%s1] sm:$0xff]
    %v23 = vld [vmem:[%s1 + $0x8] sm:$0x3]
    %v24 = vld [vmem:[%s2] sm:$0x1]
    %v26 = vlaneseq
    %v27 = vshrl.u32 %v26, 7
    %v28 = vsub.s32 0, %v27
    %v29 = vrot.slane %v24, %v28
    %vm31 = vcmask 80896
    %v33 = vsel %vm31, %v21, 0
    %vm35 = vcmask 1041408
    %v37 = vsel %vm35, %v23, 0
    %39 = vmatprep.subr.mxu0 0.0
    %40 = vmatpush1.msra.mxu0 %v22
    %41 = vmatprep.subr.mxu0 0.0
    %42 = vmatpush1.msra.mxu0 %v37
    %43 = vmatprep.subr.mxu0 0.0
    %44 = vmatpush1.msra.mxu0 0.0
    %45 = vmatprep.subr.mxu0 0.0
    %46 = vmatpush1.msra.mxu0 0.0
    %47 = vmatprep.subr.mxu0 0.0
    %48 = vmatpush1.msra.mxu0 0.0
    %49 = vmatprep.subr.mxu0 0.0
    %50 = vmatpush1.msra.mxu0 0.0
    %51 = vmatprep.subr.mxu0 0.0
    %52 = vmatpush1.msra.mxu0 0.0
    %53 = vmatprep.subr.mxu0 0.0
    %54 = vmatpush1.msra.mxu0 0.0
    %55 = vmatprep.subr.mxu0 0.0
    %56 = vmatpush1.msra.mxu0 0.0
    %57 = vmatprep.subr.mxu0 0.0
    %58 = vmatpush1.msra.mxu0 0.0
    %59 = vmatprep.subr.mxu0 0.0
    %60 = vmatpush1.msra.mxu0 0.0
    %61 = vmatprep.subr.mxu0 0.0
    %62 = vmatpush1.msra.mxu0 0.0
    %63 = vmatprep.subr.mxu0 0.0
    %64 = vmatpush1.msra.mxu0 0.0
    %65 = vmatprep.subr.mxu0 0.0
    %66 = vmatpush1.msra.mxu0 0.0
    %67 = vmatprep.subr.mxu0 0.0
    %68 = vmatpush1.msra.mxu0 0.0
    %69 = vmatprep.subr.mxu0 0.0
    %70 = vmatpush1.msra.mxu0 0.0
    %71 = vmatprep.subr.mxu0 0.0
    %72 = vmatpush1.msra.mxu0 0.0
    %73 = vmatprep.subr.mxu0 0.0
    %74 = vmatpush1.msra.mxu0 0.0
    %75 = vmatprep.subr.mxu0 0.0
    %76 = vmatpush1.msra.mxu0 0.0
    %77 = vmatprep.subr.mxu0 0.0
    %78 = vmatpush1.msra.mxu0 0.0
    %79 = vmatprep.subr.mxu0 0.0
    %80 = vmatpush1.msra.mxu0 0.0
    %81 = vmatprep.subr.mxu0 0.0
    %82 = vmatpush1.msra.mxu0 0.0
    %83 = vmatprep.subr.mxu0 0.0
    %84 = vmatpush1.msra.mxu0 0.0
    %85 = vmatprep.subr.mxu0 0.0
    %86 = vmatpush1.msra.mxu0 0.0
    %87 = vmatprep.subr.mxu0 0.0
    %88 = vmatpush1.msra.mxu0 0.0
    %89 = vmatprep.subr.mxu0 0.0
    %90 = vmatpush1.msra.mxu0 0.0
    %91 = vmatprep.subr.mxu0 0.0
    %92 = vmatpush1.msra.mxu0 0.0
    %93 = vmatprep.subr.mxu0 0.0
    %94 = vmatpush1.msra.mxu0 0.0
    %95 = vmatprep.subr.mxu0 0.0
    %96 = vmatpush1.msra.mxu0 0.0
    %97 = vmatprep.subr.mxu0 0.0
    %98 = vmatpush1.msra.mxu0 0.0
    %99 = vmatprep.subr.mxu0 0.0
    %100 = vmatpush1.msra.mxu0 0.0
    %101 = vmatprep.subr.mxu0 0.0
    %102 = vmatpush1.msra.mxu0 0.0
    %103 = vmatprep.mubr.f32.mxu0 0.0
    %104 = vmatmul.mubr.f32.gmra.mrb[0].mxu0 %v33
    %v105 = vpop.f32.mrb[0].mxu0
    %v106 = vadd.f32 %v29, %v105
    %v107 = vpop.f32.mrb[0].mxu0
    %108 = vdwg.mxu0
    %v109 = vmax.f32 %v106, 0.0
    %v110 = vld [vmem:[%s3] sm:$0xff]
    %v111 = vld [vmem:[%s3 + $0x8] sm:$0xff]
    %v112 = vld [vmem:[%s3 + $0x10] sm:$0xf]
    %v113 = vld [vmem:[%s4] sm:$0x1]
    %v115 = vlaneseq
    %v116 = vshrl.u32 %v115, 7
    %v117 = vsub.s32 0, %v116
    %v118 = vrot.slane %v113, %v117
    %vm120 = vcmask 162816
    %v122 = vsel %vm120, %v109, 0
    %vm124 = vcmask 1043456
    %v126 = vsel %vm124, %v112, 0
    %128 = vmatprep.subr.mxu0 0.0
    %129 = vmatpush1.msra.mxu0 %v110
    %130 = vmatprep.subr.mxu0 0.0
    %131 = vmatpush1.msra.mxu0 %v111
    %132 = vmatprep.subr.mxu0 0.0
    %133 = vmatpush1.msra.mxu0 %v126
    %134 = vmatprep.subr.mxu0 0.0
    %135 = vmatpush1.msra.mxu0 0.0
    %136 = vmatprep.subr.mxu0 0.0
    %137 = vmatpush1.msra.mxu0 0.0
    %138 = vmatprep.subr.mxu0 0.0
    %139 = vmatpush1.msra.mxu0 0.0
    %140 = vmatprep.subr.mxu0 0.0
    %141 = vmatpush1.msra.mxu0 0.0
    %142 = vmatprep.subr.mxu0 0.0
    %143 = vmatpush1.msra.mxu0 0.0
    %144 = vmatprep.subr.mxu0 0.0
    %145 = vmatpush1.msra.mxu0 0.0
    %146 = vmatprep.subr.mxu0 0.0
    %147 = vmatpush1.msra.mxu0 0.0
    %148 = vmatprep.subr.mxu0 0.0
    %149 = vmatpush1.msra.mxu0 0.0
    %150 = vmatprep.subr.mxu0 0.0
    %151 = vmatpush1.msra.mxu0 0.0
    %152 = vmatprep.subr.mxu0 0.0
    %153 = vmatpush1.msra.mxu0 0.0
    %154 = vmatprep.subr.mxu0 0.0
    %155 = vmatpush1.msra.mxu0 0.0
    %156 = vmatprep.subr.mxu0 0.0
    %157 = vmatpush1.msra.mxu0 0.0
    %158 = vmatprep.subr.mxu0 0.0
    %159 = vmatpush1.msra.mxu0 0.0
    %160 = vmatprep.subr.mxu0 0.0
    %161 = vmatpush1.msra.mxu0 0.0
    %162 = vmatprep.subr.mxu0 0.0
    %163 = vmatpush1.msra.mxu0 0.0
    %164 = vmatprep.subr.mxu0 0.0
    %165 = vmatpush1.msra.mxu0 0.0
    %166 = vmatprep.subr.mxu0 0.0
    %167 = vmatpush1.msra.mxu0 0.0
    %168 = vmatprep.subr.mxu0 0.0
    %169 = vmatpush1.msra.mxu0 0.0
    %170 = vmatprep.subr.mxu0 0.0
    %171 = vmatpush1.msra.mxu0 0.0
    %172 = vmatprep.subr.mxu0 0.0
    %173 = vmatpush1.msra.mxu0 0.0
    %174 = vmatprep.subr.mxu0 0.0
    %175 = vmatpush1.msra.mxu0 0.0
    %176 = vmatprep.subr.mxu0 0.0
    %177 = vmatpush1.msra.mxu0 0.0
    %178 = vmatprep.subr.mxu0 0.0
    %179 = vmatpush1.msra.mxu0 0.0
    %180 = vmatprep.subr.mxu0 0.0
    %181 = vmatpush1.msra.mxu0 0.0
    %182 = vmatprep.subr.mxu0 0.0
    %183 = vmatpush1.msra.mxu0 0.0
    %184 = vmatprep.subr.mxu0 0.0
    %185 = vmatpush1.msra.mxu0 0.0
    %186 = vmatprep.subr.mxu0 0.0
    %187 = vmatpush1.msra.mxu0 0.0
    %188 = vmatprep.subr.mxu0 0.0
    %189 = vmatpush1.msra.mxu0 0.0
    %190 = vmatprep.subr.mxu0 0.0
    %191 = vmatpush1.msra.mxu0 0.0
    %192 = vmatprep.mubr.f32.mxu0 0.0
    %193 = vmatmul.mubr.f32.gmra.mrb[0].mxu0 %v122
    %v194 = vpop.f32.mrb[0].mxu0
    %v195 = vadd.f32 %v118, %v194
    %v196 = vpop.f32.mrb[0].mxu0
    %197 = vdwg.mxu0
    %vm198 = vcmask 39936
    %199 = vst.msk [vmem:[#allocation2] sm:$0xff] %vm198, %v195
    // Predicated region
    $region22: #{tpu_custom_call.1} parent=1 // pred_check
      _
    $region23: #{tpu_custom_call.1} parent=1 // pred_check_branch
      %201 = sbr.rel (0) target = $region25
    $region24: #{tpu_custom_call.1} parent=1 // pred_region
      %s203 = ssub.s32 128, 128
      %204 = vsyncadd [#allocation3], %s203
      %s206 = sshll.u32 [#allocation2], 4
      %s207 = int_to_ptr.vmem [resolvable:$true] %s206
      %209 = dma.vmem_to_hbm [thread:$0]  %s207, 128, %s5, [#allocation3]
    $region25: #{tpu_custom_call.1} parent=1 // pred_fallthru
      _
    // Predicated region
    $region26: #{tpu_custom_call.1} parent=1 // pred_check
      _
    $region27: #{tpu_custom_call.1} parent=1 // pred_check_branch
      %211 = sbr.rel (0) target = $region29
    $region28: #{tpu_custom_call.1} parent=1 // pred_region
      %212 = dma.done [#allocation3], 128
    $region29: #{tpu_custom_call.1} parent=1 // pred_fallthru
      _
    %213 = vsyncpa [#allocation3], 1

</llo_original>
